<compile_context>
chip_gen: v6e
topology: v6e:2x2x1
jax: 0.10.0
libtpu: 0.0.40
codegen_flags: <defaults>
</compile_context>

<pallas_src>
import numpy as np

import jax
import jax.numpy as jnp
from jax import lax
from jax.experimental import pallas as pl
from jax.experimental.pallas import tpu as pltpu

INPUT_SIZE = 32     # hidden size == input size in the module
NUM_OUTPUT = 16
NUM_LAYERS = 2
SEQ_LEN = 8
OUT_PAD = 128       # lane-dense padded output width (sliced back to NUM_OUTPUT)


def lstm_kernel(x_ref, w_x_ref, b_ref, w_rec_ref, w_out_ref, b_out_ref, y_ref):
    """Whole forward pass in one invocation (shapes are tiny, grid=()).

    x_ref     : (L, H)      f32   input sequence (time-major, unbatched)
    w_x_ref   : (H, 8H)     bf16  layer-0 input->gates weights, gate-major
                                  interleaved layout, i/f/o pre-scaled by 0.5
    b_ref     : (1, 8H)     f32   combined biases for both layers (same layout)
    w_rec_ref : (2H, 8H)    bf16  fused recurrent RHS: rows 0:H = h0 contrib
                                  (layer-0 recurrent + layer-1 input), rows
                                  H:2H = h1 contrib (layer-1 recurrent)
    w_out_ref : (H, 128)    bf16  final Linear weight (transposed, zero-padded)
    b_out_ref : (1, 128)    f32   final Linear bias (zero-padded)
    y_ref     : (L, 128)    f32   lane-dense output (sliced in the wrapper)
    """
    L, H = x_ref.shape
    H2 = 2 * H                     # 64  (both layers' hidden side by side)
    G2 = 8 * H                     # 256 (both layers' 4 gates side by side)

    x = x_ref[...]                                           # (L, H) f32
    w_rec = w_rec_ref[...]                                   # (2H, 8H) bf16

    # Hoisted input->gates for layer 0 (+ biases for both layers); one
    # (L,H)@(H,8H) bf16 MXU pass, off the serial chain.
    gxb = jnp.dot(x.astype(jnp.bfloat16), w_x_ref[...],
                  preferred_element_type=jnp.float32) + b_ref[...]   # (L, 8H)

    # Static lane masks, hoisted once.
    lane = lax.broadcasted_iota(jnp.int32, (1, G2), 1)
    is_g = (lane >= 4 * H) & (lane < 6 * H)                  # g-gate lanes (g0|g1)
    keep_l0 = (lax.broadcasted_iota(jnp.int32, (1, H2), 1) < H).astype(jnp.float32)

    hh = jnp.zeros((1, H2), jnp.float32)                     # [h_layer0 | h_layer1]
    cc = jnp.zeros((1, H2), jnp.float32)                     # [c_layer0 | c_layer1]
    outs = []

    # Wavefronted recurrence, fully unrolled (L static): wave w computes
    # layer-0 step w and layer-1 step w-1 from the SAME fused matmul.
    for w in range(L + 1):
        rec = jnp.dot(hh.astype(jnp.bfloat16), w_rec,
                      preferred_element_type=jnp.float32)    # (1, 8H)
        t = min(w, L - 1)                                    # static index
        gates = rec + gxb[t:t + 1, :]                        # (1, 8H)

        # One full-width transcendental per wave: tanh for the g gates,
        # 0.5*tanh(z/2)+0.5 == sigmoid(z) for i/f/o (weights pre-scaled 0.5).
        th = jnp.tanh(gates)
        act = jnp.where(is_g, th, 0.5 * th + 0.5)            # (1, 8H)

        i_g = act[:, 0 * H2:1 * H2]                          # [i0 | i1]
        f_g = act[:, 1 * H2:2 * H2]                          # [f0 | f1]
        g_g = act[:, 2 * H2:3 * H2]                          # [g0 | g1]
        o_g = act[:, 3 * H2:4 * H2]                          # [o0 | o1]

        cc = f_g * cc + i_g * g_g                            # both layers at once
        hh = o_g * jnp.tanh(cc)

        if w == 0:
            # layer 1 has not seen a real input yet; keep its state at zero.
            hh = hh * keep_l0
            cc = cc * keep_l0
        else:
            outs.append(hh[:, H:H2])                         # layer-1 h at step w-1

    seq = jnp.concatenate(outs, axis=0)                      # (L, H) layer-1 outputs

    # Residual (lstm_out + x_0) then final Linear, lane-dense store.
    y_ref[...] = (jnp.dot((seq + x).astype(jnp.bfloat16), w_out_ref[...],
                          preferred_element_type=jnp.float32)
                  + b_out_ref[...])


@jax.jit
def lstm_forward(x, w_x, b, w_rec, w_out_p, b_out_p):
    L = x.shape[0]
    y_pad = pl.pallas_call(
        lstm_kernel,
        out_shape=jax.ShapeDtypeStruct((L, OUT_PAD), jnp.float32),
        in_specs=[pl.BlockSpec(memory_space=pltpu.MemorySpace.VMEM)] * 6,
        out_specs=pl.BlockSpec(memory_space=pltpu.MemorySpace.VMEM),
    )(x, w_x, b, w_rec, w_out_p, b_out_p)
    return y_pad[:, :NUM_OUTPUT]


def init_params(key):
    """Deterministic init with the exact PyTorch param shapes.

    nn.LSTM(H, H, num_layers=2): weight_ih_l{k} (4H,H), weight_hh_l{k} (4H,H),
    bias_ih_l{k} (4H,), bias_hh_l{k} (4H,)  — gate order [i, f, g, o].
    nn.Linear(H, NUM_OUTPUT): weight (NUM_OUTPUT, H), bias (NUM_OUTPUT,).
    """
    H, NO, NL = INPUT_SIZE, NUM_OUTPUT, NUM_LAYERS
    bound = 1.0 / np.sqrt(H)
    ks = jax.random.split(key, 6)
    u = lambda k, s: jax.random.uniform(k, s, minval=-bound, maxval=bound,
                                        dtype=jnp.float32)
    w_ih = u(ks[0], (NL, 4 * H, H))
    w_hh = u(ks[1], (NL, 4 * H, H))
    b_ih = u(ks[2], (NL, 4 * H))
    b_hh = u(ks[3], (NL, 4 * H))
    w_out = u(ks[4], (NO, H))
    b_out = u(ks[5], (NO,))
    return w_ih, w_hh, b_ih, b_hh, w_out, b_out


def prep_params(w_ih, w_hh, b_ih, b_hh, w_out, b_out):
    """One-time, host-side weight prep (hoisted out of the per-call path).

    * transpose + reorder gate columns into the gate-major, layer-interleaved
      layout [i0 i1 f0 f1 g0 g1 o0 o1] (32 lanes per block, 256 total),
    * pre-scale the i/f/o columns and biases by 0.5 (sigmoid-as-tanh trick),
    * fuse the two layers' recurrent/input weights into one (64,256) RHS,
    * zero-pad the Linear weight/bias to a lane-dense 128-wide output,
    * cast all matmul weights to bf16 (biases stay f32).
    """
    H, NO = INPUT_SIZE, NUM_OUTPUT
    w_ih = np.asarray(w_ih, np.float32)
    w_hh = np.asarray(w_hh, np.float32)
    b_ih = np.asarray(b_ih, np.float32)
    b_hh = np.asarray(b_hh, np.float32)
    w_out = np.asarray(w_out, np.float32)
    b_out = np.asarray(b_out, np.float32)

    # 0.5 pre-scale on i/f/o gate rows (exact in bf16: power-of-two scale).
    gscale = np.concatenate([np.full(H, 0.5), np.full(H, 0.5),
                             np.full(H, 1.0), np.full(H, 0.5)]).astype(np.float32)
    wih_s = w_ih * gscale[None, :, None]          # (NL, 4H, H)
    whh_s = w_hh * gscale[None, :, None]
    b_s = (b_ih + b_hh) * gscale[None, :]         # (NL, 4H)

    def place_cols(dst, src_t, layer):
        # src_t: (rows, 4H) in PyTorch [i f g o] order -> gate-major interleaved
        # destination columns, layer slot `layer`.
        for q in range(4):
            dst[:, (2 * q + layer) * H:(2 * q + layer + 1) * H] = \
                src_t[:, q * H:(q + 1) * H]

    w_x = np.zeros((H, 8 * H), np.float32)        # layer-0 input -> gates
    place_cols(w_x, wih_s[0].T, 0)

    b_both = np.zeros((1, 8 * H), np.float32)     # both layers' combined biases
    place_cols(b_both, b_s[0][None, :], 0)
    place_cols(b_both, b_s[1][None, :], 1)

    w_rec = np.zeros((2 * H, 8 * H), np.float32)  # fused per-wave recurrent RHS
    place_cols(w_rec[:H], whh_s[0].T, 0)          # h_l0 -> layer-0 gates
    place_cols(w_rec[:H], wih_s[1].T, 1)          # h_l0 -> layer-1 gates (input)
    place_cols(w_rec[H:], whh_s[1].T, 1)          # h_l1 -> layer-1 gates

    w_out_p = np.zeros((H, OUT_PAD), np.float32)
    w_out_p[:, :NO] = w_out.T
    b_out_p = np.zeros((1, OUT_PAD), np.float32)
    b_out_p[0, :NO] = b_out

    return (jnp.asarray(w_x, jnp.bfloat16),
            jnp.asarray(b_both, jnp.float32),
            jnp.asarray(w_rec, jnp.bfloat16),
            jnp.asarray(w_out_p, jnp.bfloat16),
            jnp.asarray(b_out_p, jnp.float32))


def lstm_ref(x, w_ih, w_hh, b_ih, b_hh, w_out, b_out, matmul_dtype=None):
    """Pure-JAX reference with the PyTorch module semantics.

    matmul_dtype=None   -> f32 HIGHEST-precision dots (semantic reference).
    matmul_dtype=bf16   -> bf16 operands / f32 accumulation (kernel-precision).
    """
    H = INPUT_SIZE

    def mm(a, bm):
        if matmul_dtype is not None:
            return jnp.dot(a.astype(matmul_dtype), bm.astype(matmul_dtype),
                           preferred_element_type=jnp.float32)
        return jnp.dot(a, bm, precision=lax.Precision.HIGHEST)

    seq = x
    for l in range(NUM_LAYERS):
        wih_t, whh_t = w_ih[l].T, w_hh[l].T
        bias = b_ih[l] + b_hh[l]
        h = jnp.zeros((H,), jnp.float32)
        c = jnp.zeros((H,), jnp.float32)
        outs = []
        for t in range(SEQ_LEN):
            g = mm(seq[t][None, :], wih_t)[0] + mm(h[None, :], whh_t)[0] + bias
            i_g = jax.nn.sigmoid(g[0 * H:1 * H])
            f_g = jax.nn.sigmoid(g[1 * H:2 * H])
            g_g = jnp.tanh(g[2 * H:3 * H])
            o_g = jax.nn.sigmoid(g[3 * H:4 * H])
            c = f_g * c + i_g * g_g
            h = o_g * jnp.tanh(c)
            outs.append(h)
        seq = jnp.stack(outs)
    return mm(seq + x, w_out.T) + b_out[None, :]


if __name__ == "__main__":
    key = jax.random.PRNGKey(0)
    kx, kp = jax.random.split(key)
    x = jax.random.normal(kx, (SEQ_LEN, INPUT_SIZE), dtype=jnp.float32)

    pt_params = init_params(kp)                 # PyTorch-layout params
    kparams = prep_params(*pt_params)           # one-time kernel-layout prep

    y = lstm_forward(x, *kparams)
    jax.block_until_ready(y)
    assert y.shape == (SEQ_LEN, NUM_OUTPUT)

    y_np = np.asarray(y)
    # Tight check vs. a pure-JAX reference at the kernel's matmul precision.
    y_bf16 = np.asarray(lstm_ref(x, *pt_params, matmul_dtype=jnp.bfloat16))
    assert np.allclose(y_np, y_bf16, rtol=2e-3, atol=2e-3), \
        float(np.max(np.abs(y_np - y_bf16)))
    # Loose check vs. the full-f32 (HIGHEST precision) semantic reference.
    y_f32 = np.asarray(lstm_ref(x, *pt_params))
    assert np.allclose(y_np, y_f32, rtol=1e-1, atol=1e-1), \
        float(np.max(np.abs(y_np - y_f32)))

    print("KERNEL_OK")
</pallas_src>

<mosaic_0001>
module attributes {stable_mosaic.version = 11 : i64} {
  func.func @lstm_kernel(%arg0: memref<8x32xf32, #tpu.memory_space<vmem>>, %arg1: memref<32x256xbf16, #tpu.memory_space<vmem>>, %arg2: memref<1x256xf32, #tpu.memory_space<vmem>>, %arg3: memref<64x256xbf16, #tpu.memory_space<vmem>>, %arg4: memref<32x128xbf16, #tpu.memory_space<vmem>>, %arg5: memref<1x128xf32, #tpu.memory_space<vmem>>, %arg6: memref<8x128xf32, #tpu.memory_space<vmem>>) attributes {dimension_semantics = [], scalar_prefetch = 0 : i64, scratch_operands = 0 : i64, tpu.core_type = #tpu.core_type<tc>} {
    %c0 = arith.constant 0 : index
    %c0_0 = arith.constant 0 : index
    %0 = vector.load %arg0[%c0, %c0_0] : memref<8x32xf32, #tpu.memory_space<vmem>>, vector<8x32xf32>
    %c0_1 = arith.constant 0 : index
    %c0_2 = arith.constant 0 : index
    %1 = vector.load %arg3[%c0_1, %c0_2] : memref<64x256xbf16, #tpu.memory_space<vmem>>, vector<64x256xbf16>
    %2 = arith.truncf %0 : vector<8x32xf32> to vector<8x32xbf16>
    %c0_3 = arith.constant 0 : index
    %c0_4 = arith.constant 0 : index
    %3 = vector.load %arg1[%c0_3, %c0_4] : memref<32x256xbf16, #tpu.memory_space<vmem>>, vector<32x256xbf16>
    %cst = arith.constant dense<0.000000e+00> : vector<8x256xf32>
    %4 = tpu.matmul %2, %3, %cst {dimension_numbers = #tpu.dot_dimension_numbers<[1], [0], [0], [1], [0, 0, 1, 1], [], []>} : vector<8x32xbf16>, vector<32x256xbf16>, vector<8x256xf32> -> vector<8x256xf32>
    %c0_5 = arith.constant 0 : index
    %c0_6 = arith.constant 0 : index
    %5 = vector.load %arg2[%c0_5, %c0_6] : memref<1x256xf32, #tpu.memory_space<vmem>>, vector<1x256xf32>
    %6 = vector.broadcast %5 : vector<1x256xf32> to vector<8x256xf32>
    %7 = arith.addf %4, %6 : vector<8x256xf32>
    %8 = tpu.iota {dimensions = array<i32: 1>} : vector<1x256xi32>
    %c128_i32 = arith.constant 128 : i32
    %9 = vector.broadcast %c128_i32 : i32 to vector<1x256xi32>
    %10 = arith.cmpi sge, %8, %9 : vector<1x256xi32>
    %c192_i32 = arith.constant 192 : i32
    %11 = vector.broadcast %c192_i32 : i32 to vector<1x256xi32>
    %12 = arith.cmpi slt, %8, %11 : vector<1x256xi32>
    %13 = arith.andi %10, %12 : vector<1x256xi1>
    %14 = tpu.iota {dimensions = array<i32: 1>} : vector<1x64xi32>
    %c32_i32 = arith.constant 32 : i32
    %15 = vector.broadcast %c32_i32 : i32 to vector<1x64xi32>
    %16 = arith.cmpi slt, %14, %15 : vector<1x64xi32>
    %17 = arith.extui %16 : vector<1x64xi1> to vector<1x64xi32>
    %18 = arith.sitofp %17 : vector<1x64xi32> to vector<1x64xf32>
    %cst_7 = arith.constant 0.000000e+00 : f32
    %19 = vector.broadcast %cst_7 : f32 to vector<1x64xf32>
    %cst_8 = arith.constant 0.000000e+00 : f32
    %20 = vector.broadcast %cst_8 : f32 to vector<1x64xf32>
    %21 = arith.truncf %19 : vector<1x64xf32> to vector<1x64xbf16>
    %cst_9 = arith.constant dense<0.000000e+00> : vector<1x256xf32>
    %22 = tpu.matmul %21, %1, %cst_9 {dimension_numbers = #tpu.dot_dimension_numbers<[1], [0], [0], [1], [0, 0, 1, 1], [], []>} : vector<1x64xbf16>, vector<64x256xbf16>, vector<1x256xf32> -> vector<1x256xf32>
    %23 = vector.extract_strided_slice %7 {offsets = [0, 0], sizes = [1, 256], strides = [1, 1]} : vector<8x256xf32> to vector<1x256xf32>
    %24 = arith.addf %22, %23 : vector<1x256xf32>
    %25 = math.tanh %24 : vector<1x256xf32>
    %cst_10 = arith.constant 5.000000e-01 : f32
    %26 = vector.broadcast %cst_10 : f32 to vector<1x256xf32>
    %27 = arith.mulf %26, %25 : vector<1x256xf32>
    %cst_11 = arith.constant 5.000000e-01 : f32
    %28 = vector.broadcast %cst_11 : f32 to vector<1x256xf32>
    %29 = arith.addf %27, %28 : vector<1x256xf32>
    %30 = arith.select %13, %25, %29 : vector<1x256xi1>, vector<1x256xf32>
    %31 = vector.extract_strided_slice %30 {offsets = [0, 0], sizes = [1, 64], strides = [1, 1]} : vector<1x256xf32> to vector<1x64xf32>
    %32 = vector.extract_strided_slice %30 {offsets = [0, 64], sizes = [1, 64], strides = [1, 1]} : vector<1x256xf32> to vector<1x64xf32>
    %33 = vector.extract_strided_slice %30 {offsets = [0, 128], sizes = [1, 64], strides = [1, 1]} : vector<1x256xf32> to vector<1x64xf32>
    %34 = vector.extract_strided_slice %30 {offsets = [0, 192], sizes = [1, 64], strides = [1, 1]} : vector<1x256xf32> to vector<1x64xf32>
    %35 = arith.mulf %32, %20 : vector<1x64xf32>
    %36 = arith.mulf %31, %33 : vector<1x64xf32>
    %37 = arith.addf %35, %36 : vector<1x64xf32>
    %38 = math.tanh %37 : vector<1x64xf32>
    %39 = arith.mulf %34, %38 : vector<1x64xf32>
    %40 = arith.mulf %39, %18 : vector<1x64xf32>
    %41 = arith.mulf %37, %18 : vector<1x64xf32>
    %42 = arith.truncf %40 : vector<1x64xf32> to vector<1x64xbf16>
    %cst_12 = arith.constant dense<0.000000e+00> : vector<1x256xf32>
    %43 = tpu.matmul %42, %1, %cst_12 {dimension_numbers = #tpu.dot_dimension_numbers<[1], [0], [0], [1], [0, 0, 1, 1], [], []>} : vector<1x64xbf16>, vector<64x256xbf16>, vector<1x256xf32> -> vector<1x256xf32>
    %44 = vector.extract_strided_slice %7 {offsets = [1, 0], sizes = [1, 256], strides = [1, 1]} : vector<8x256xf32> to vector<1x256xf32>
    %45 = arith.addf %43, %44 : vector<1x256xf32>
    %46 = math.tanh %45 : vector<1x256xf32>
    %cst_13 = arith.constant 5.000000e-01 : f32
    %47 = vector.broadcast %cst_13 : f32 to vector<1x256xf32>
    %48 = arith.mulf %47, %46 : vector<1x256xf32>
    %cst_14 = arith.constant 5.000000e-01 : f32
    %49 = vector.broadcast %cst_14 : f32 to vector<1x256xf32>
    %50 = arith.addf %48, %49 : vector<1x256xf32>
    %51 = arith.select %13, %46, %50 : vector<1x256xi1>, vector<1x256xf32>
    %52 = vector.extract_strided_slice %51 {offsets = [0, 0], sizes = [1, 64], strides = [1, 1]} : vector<1x256xf32> to vector<1x64xf32>
    %53 = vector.extract_strided_slice %51 {offsets = [0, 64], sizes = [1, 64], strides = [1, 1]} : vector<1x256xf32> to vector<1x64xf32>
    %54 = vector.extract_strided_slice %51 {offsets = [0, 128], sizes = [1, 64], strides = [1, 1]} : vector<1x256xf32> to vector<1x64xf32>
    %55 = vector.extract_strided_slice %51 {offsets = [0, 192], sizes = [1, 64], strides = [1, 1]} : vector<1x256xf32> to vector<1x64xf32>
    %56 = arith.mulf %53, %41 : vector<1x64xf32>
    %57 = arith.mulf %52, %54 : vector<1x64xf32>
    %58 = arith.addf %56, %57 : vector<1x64xf32>
    %59 = math.tanh %58 : vector<1x64xf32>
    %60 = arith.mulf %55, %59 : vector<1x64xf32>
    %61 = vector.extract_strided_slice %60 {offsets = [0, 32], sizes = [1, 32], strides = [1, 1]} : vector<1x64xf32> to vector<1x32xf32>
    %62 = arith.truncf %60 : vector<1x64xf32> to vector<1x64xbf16>
    %cst_15 = arith.constant dense<0.000000e+00> : vector<1x256xf32>
    %63 = tpu.matmul %62, %1, %cst_15 {dimension_numbers = #tpu.dot_dimension_numbers<[1], [0], [0], [1], [0, 0, 1, 1], [], []>} : vector<1x64xbf16>, vector<64x256xbf16>, vector<1x256xf32> -> vector<1x256xf32>
    %64 = vector.extract_strided_slice %7 {offsets = [2, 0], sizes = [1, 256], strides = [1, 1]} : vector<8x256xf32> to vector<1x256xf32>
    %65 = arith.addf %63, %64 : vector<1x256xf32>
    %66 = math.tanh %65 : vector<1x256xf32>
    %cst_16 = arith.constant 5.000000e-01 : f32
    %67 = vector.broadcast %cst_16 : f32 to vector<1x256xf32>
    %68 = arith.mulf %67, %66 : vector<1x256xf32>
    %cst_17 = arith.constant 5.000000e-01 : f32
    %69 = vector.broadcast %cst_17 : f32 to vector<1x256xf32>
    %70 = arith.addf %68, %69 : vector<1x256xf32>
    %71 = arith.select %13, %66, %70 : vector<1x256xi1>, vector<1x256xf32>
    %72 = vector.extract_strided_slice %71 {offsets = [0, 0], sizes = [1, 64], strides = [1, 1]} : vector<1x256xf32> to vector<1x64xf32>
    %73 = vector.extract_strided_slice %71 {offsets = [0, 64], sizes = [1, 64], strides = [1, 1]} : vector<1x256xf32> to vector<1x64xf32>
    %74 = vector.extract_strided_slice %71 {offsets = [0, 128], sizes = [1, 64], strides = [1, 1]} : vector<1x256xf32> to vector<1x64xf32>
    %75 = vector.extract_strided_slice %71 {offsets = [0, 192], sizes = [1, 64], strides = [1, 1]} : vector<1x256xf32> to vector<1x64xf32>
    %76 = arith.mulf %73, %58 : vector<1x64xf32>
    %77 = arith.mulf %72, %74 : vector<1x64xf32>
    %78 = arith.addf %76, %77 : vector<1x64xf32>
    %79 = math.tanh %78 : vector<1x64xf32>
    %80 = arith.mulf %75, %79 : vector<1x64xf32>
    %81 = vector.extract_strided_slice %80 {offsets = [0, 32], sizes = [1, 32], strides = [1, 1]} : vector<1x64xf32> to vector<1x32xf32>
    %82 = arith.truncf %80 : vector<1x64xf32> to vector<1x64xbf16>
    %cst_18 = arith.constant dense<0.000000e+00> : vector<1x256xf32>
    %83 = tpu.matmul %82, %1, %cst_18 {dimension_numbers = #tpu.dot_dimension_numbers<[1], [0], [0], [1], [0, 0, 1, 1], [], []>} : vector<1x64xbf16>, vector<64x256xbf16>, vector<1x256xf32> -> vector<1x256xf32>
    %84 = vector.extract_strided_slice %7 {offsets = [3, 0], sizes = [1, 256], strides = [1, 1]} : vector<8x256xf32> to vector<1x256xf32>
    %85 = arith.addf %83, %84 : vector<1x256xf32>
    %86 = math.tanh %85 : vector<1x256xf32>
    %cst_19 = arith.constant 5.000000e-01 : f32
    %87 = vector.broadcast %cst_19 : f32 to vector<1x256xf32>
    %88 = arith.mulf %87, %86 : vector<1x256xf32>
    %cst_20 = arith.constant 5.000000e-01 : f32
    %89 = vector.broadcast %cst_20 : f32 to vector<1x256xf32>
    %90 = arith.addf %88, %89 : vector<1x256xf32>
    %91 = arith.select %13, %86, %90 : vector<1x256xi1>, vector<1x256xf32>
    %92 = vector.extract_strided_slice %91 {offsets = [0, 0], sizes = [1, 64], strides = [1, 1]} : vector<1x256xf32> to vector<1x64xf32>
    %93 = vector.extract_strided_slice %91 {offsets = [0, 64], sizes = [1, 64], strides = [1, 1]} : vector<1x256xf32> to vector<1x64xf32>
    %94 = vector.extract_strided_slice %91 {offsets = [0, 128], sizes = [1, 64], strides = [1, 1]} : vector<1x256xf32> to vector<1x64xf32>
    %95 = vector.extract_strided_slice %91 {offsets = [0, 192], sizes = [1, 64], strides = [1, 1]} : vector<1x256xf32> to vector<1x64xf32>
    %96 = arith.mulf %93, %78 : vector<1x64xf32>
    %97 = arith.mulf %92, %94 : vector<1x64xf32>
    %98 = arith.addf %96, %97 : vector<1x64xf32>
    %99 = math.tanh %98 : vector<1x64xf32>
    %100 = arith.mulf %95, %99 : vector<1x64xf32>
    %101 = vector.extract_strided_slice %100 {offsets = [0, 32], sizes = [1, 32], strides = [1, 1]} : vector<1x64xf32> to vector<1x32xf32>
    %102 = arith.truncf %100 : vector<1x64xf32> to vector<1x64xbf16>
    %cst_21 = arith.constant dense<0.000000e+00> : vector<1x256xf32>
    %103 = tpu.matmul %102, %1, %cst_21 {dimension_numbers = #tpu.dot_dimension_numbers<[1], [0], [0], [1], [0, 0, 1, 1], [], []>} : vector<1x64xbf16>, vector<64x256xbf16>, vector<1x256xf32> -> vector<1x256xf32>
    %104 = vector.extract_strided_slice %7 {offsets = [4, 0], sizes = [1, 256], strides = [1, 1]} : vector<8x256xf32> to vector<1x256xf32>
    %105 = arith.addf %103, %104 : vector<1x256xf32>
    %106 = math.tanh %105 : vector<1x256xf32>
    %cst_22 = arith.constant 5.000000e-01 : f32
    %107 = vector.broadcast %cst_22 : f32 to vector<1x256xf32>
    %108 = arith.mulf %107, %106 : vector<1x256xf32>
    %cst_23 = arith.constant 5.000000e-01 : f32
    %109 = vector.broadcast %cst_23 : f32 to vector<1x256xf32>
    %110 = arith.addf %108, %109 : vector<1x256xf32>
    %111 = arith.select %13, %106, %110 : vector<1x256xi1>, vector<1x256xf32>
    %112 = vector.extract_strided_slice %111 {offsets = [0, 0], sizes = [1, 64], strides = [1, 1]} : vector<1x256xf32> to vector<1x64xf32>
    %113 = vector.extract_strided_slice %111 {offsets = [0, 64], sizes = [1, 64], strides = [1, 1]} : vector<1x256xf32> to vector<1x64xf32>
    %114 = vector.extract_strided_slice %111 {offsets = [0, 128], sizes = [1, 64], strides = [1, 1]} : vector<1x256xf32> to vector<1x64xf32>
    %115 = vector.extract_strided_slice %111 {offsets = [0, 192], sizes = [1, 64], strides = [1, 1]} : vector<1x256xf32> to vector<1x64xf32>
    %116 = arith.mulf %113, %98 : vector<1x64xf32>
    %117 = arith.mulf %112, %114 : vector<1x64xf32>
    %118 = arith.addf %116, %117 : vector<1x64xf32>
    %119 = math.tanh %118 : vector<1x64xf32>
    %120 = arith.mulf %115, %119 : vector<1x64xf32>
    %121 = vector.extract_strided_slice %120 {offsets = [0, 32], sizes = [1, 32], strides = [1, 1]} : vector<1x64xf32> to vector<1x32xf32>
    %122 = arith.truncf %120 : vector<1x64xf32> to vector<1x64xbf16>
    %cst_24 = arith.constant dense<0.000000e+00> : vector<1x256xf32>
    %123 = tpu.matmul %122, %1, %cst_24 {dimension_numbers = #tpu.dot_dimension_numbers<[1], [0], [0], [1], [0, 0, 1, 1], [], []>} : vector<1x64xbf16>, vector<64x256xbf16>, vector<1x256xf32> -> vector<1x256xf32>
    %124 = vector.extract_strided_slice %7 {offsets = [5, 0], sizes = [1, 256], strides = [1, 1]} : vector<8x256xf32> to vector<1x256xf32>
    %125 = arith.addf %123, %124 : vector<1x256xf32>
    %126 = math.tanh %125 : vector<1x256xf32>
    %cst_25 = arith.constant 5.000000e-01 : f32
    %127 = vector.broadcast %cst_25 : f32 to vector<1x256xf32>
    %128 = arith.mulf %127, %126 : vector<1x256xf32>
    %cst_26 = arith.constant 5.000000e-01 : f32
    %129 = vector.broadcast %cst_26 : f32 to vector<1x256xf32>
    %130 = arith.addf %128, %129 : vector<1x256xf32>
    %131 = arith.select %13, %126, %130 : vector<1x256xi1>, vector<1x256xf32>
    %132 = vector.extract_strided_slice %131 {offsets = [0, 0], sizes = [1, 64], strides = [1, 1]} : vector<1x256xf32> to vector<1x64xf32>
    %133 = vector.extract_strided_slice %131 {offsets = [0, 64], sizes = [1, 64], strides = [1, 1]} : vector<1x256xf32> to vector<1x64xf32>
    %134 = vector.extract_strided_slice %131 {offsets = [0, 128], sizes = [1, 64], strides = [1, 1]} : vector<1x256xf32> to vector<1x64xf32>
    %135 = vector.extract_strided_slice %131 {offsets = [0, 192], sizes = [1, 64], strides = [1, 1]} : vector<1x256xf32> to vector<1x64xf32>
    %136 = arith.mulf %133, %118 : vector<1x64xf32>
    %137 = arith.mulf %132, %134 : vector<1x64xf32>
    %138 = arith.addf %136, %137 : vector<1x64xf32>
    %139 = math.tanh %138 : vector<1x64xf32>
    %140 = arith.mulf %135, %139 : vector<1x64xf32>
    %141 = vector.extract_strided_slice %140 {offsets = [0, 32], sizes = [1, 32], strides = [1, 1]} : vector<1x64xf32> to vector<1x32xf32>
    %142 = arith.truncf %140 : vector<1x64xf32> to vector<1x64xbf16>
    %cst_27 = arith.constant dense<0.000000e+00> : vector<1x256xf32>
    %143 = tpu.matmul %142, %1, %cst_27 {dimension_numbers = #tpu.dot_dimension_numbers<[1], [0], [0], [1], [0, 0, 1, 1], [], []>} : vector<1x64xbf16>, vector<64x256xbf16>, vector<1x256xf32> -> vector<1x256xf32>
    %144 = vector.extract_strided_slice %7 {offsets = [6, 0], sizes = [1, 256], strides = [1, 1]} : vector<8x256xf32> to vector<1x256xf32>
    %145 = arith.addf %143, %144 : vector<1x256xf32>
    %146 = math.tanh %145 : vector<1x256xf32>
    %cst_28 = arith.constant 5.000000e-01 : f32
    %147 = vector.broadcast %cst_28 : f32 to vector<1x256xf32>
    %148 = arith.mulf %147, %146 : vector<1x256xf32>
    %cst_29 = arith.constant 5.000000e-01 : f32
    %149 = vector.broadcast %cst_29 : f32 to vector<1x256xf32>
    %150 = arith.addf %148, %149 : vector<1x256xf32>
    %151 = arith.select %13, %146, %150 : vector<1x256xi1>, vector<1x256xf32>
    %152 = vector.extract_strided_slice %151 {offsets = [0, 0], sizes = [1, 64], strides = [1, 1]} : vector<1x256xf32> to vector<1x64xf32>
    %153 = vector.extract_strided_slice %151 {offsets = [0, 64], sizes = [1, 64], strides = [1, 1]} : vector<1x256xf32> to vector<1x64xf32>
    %154 = vector.extract_strided_slice %151 {offsets = [0, 128], sizes = [1, 64], strides = [1, 1]} : vector<1x256xf32> to vector<1x64xf32>
    %155 = vector.extract_strided_slice %151 {offsets = [0, 192], sizes = [1, 64], strides = [1, 1]} : vector<1x256xf32> to vector<1x64xf32>
    %156 = arith.mulf %153, %138 : vector<1x64xf32>
    %157 = arith.mulf %152, %154 : vector<1x64xf32>
    %158 = arith.addf %156, %157 : vector<1x64xf32>
    %159 = math.tanh %158 : vector<1x64xf32>
    %160 = arith.mulf %155, %159 : vector<1x64xf32>
    %161 = vector.extract_strided_slice %160 {offsets = [0, 32], sizes = [1, 32], strides = [1, 1]} : vector<1x64xf32> to vector<1x32xf32>
    %162 = arith.truncf %160 : vector<1x64xf32> to vector<1x64xbf16>
    %cst_30 = arith.constant dense<0.000000e+00> : vector<1x256xf32>
    %163 = tpu.matmul %162, %1, %cst_30 {dimension_numbers = #tpu.dot_dimension_numbers<[1], [0], [0], [1], [0, 0, 1, 1], [], []>} : vector<1x64xbf16>, vector<64x256xbf16>, vector<1x256xf32> -> vector<1x256xf32>
    %164 = vector.extract_strided_slice %7 {offsets = [7, 0], sizes = [1, 256], strides = [1, 1]} : vector<8x256xf32> to vector<1x256xf32>
    %165 = arith.addf %163, %164 : vector<1x256xf32>
    %166 = math.tanh %165 : vector<1x256xf32>
    %cst_31 = arith.constant 5.000000e-01 : f32
    %167 = vector.broadcast %cst_31 : f32 to vector<1x256xf32>
    %168 = arith.mulf %167, %166 : vector<1x256xf32>
    %cst_32 = arith.constant 5.000000e-01 : f32
    %169 = vector.broadcast %cst_32 : f32 to vector<1x256xf32>
    %170 = arith.addf %168, %169 : vector<1x256xf32>
    %171 = arith.select %13, %166, %170 : vector<1x256xi1>, vector<1x256xf32>
    %172 = vector.extract_strided_slice %171 {offsets = [0, 0], sizes = [1, 64], strides = [1, 1]} : vector<1x256xf32> to vector<1x64xf32>
    %173 = vector.extract_strided_slice %171 {offsets = [0, 64], sizes = [1, 64], strides = [1, 1]} : vector<1x256xf32> to vector<1x64xf32>
    %174 = vector.extract_strided_slice %171 {offsets = [0, 128], sizes = [1, 64], strides = [1, 1]} : vector<1x256xf32> to vector<1x64xf32>
    %175 = vector.extract_strided_slice %171 {offsets = [0, 192], sizes = [1, 64], strides = [1, 1]} : vector<1x256xf32> to vector<1x64xf32>
    %176 = arith.mulf %173, %158 : vector<1x64xf32>
    %177 = arith.mulf %172, %174 : vector<1x64xf32>
    %178 = arith.addf %176, %177 : vector<1x64xf32>
    %179 = math.tanh %178 : vector<1x64xf32>
    %180 = arith.mulf %175, %179 : vector<1x64xf32>
    %181 = vector.extract_strided_slice %180 {offsets = [0, 32], sizes = [1, 32], strides = [1, 1]} : vector<1x64xf32> to vector<1x32xf32>
    %182 = arith.truncf %180 : vector<1x64xf32> to vector<1x64xbf16>
    %cst_33 = arith.constant dense<0.000000e+00> : vector<1x256xf32>
    %183 = tpu.matmul %182, %1, %cst_33 {dimension_numbers = #tpu.dot_dimension_numbers<[1], [0], [0], [1], [0, 0, 1, 1], [], []>} : vector<1x64xbf16>, vector<64x256xbf16>, vector<1x256xf32> -> vector<1x256xf32>
    %184 = vector.extract_strided_slice %7 {offsets = [7, 0], sizes = [1, 256], strides = [1, 1]} : vector<8x256xf32> to vector<1x256xf32>
    %185 = arith.addf %183, %184 : vector<1x256xf32>
    %186 = math.tanh %185 : vector<1x256xf32>
    %cst_34 = arith.constant 5.000000e-01 : f32
    %187 = vector.broadcast %cst_34 : f32 to vector<1x256xf32>
    %188 = arith.mulf %187, %186 : vector<1x256xf32>
    %cst_35 = arith.constant 5.000000e-01 : f32
    %189 = vector.broadcast %cst_35 : f32 to vector<1x256xf32>
    %190 = arith.addf %188, %189 : vector<1x256xf32>
    %191 = arith.select %13, %186, %190 : vector<1x256xi1>, vector<1x256xf32>
    %192 = vector.extract_strided_slice %191 {offsets = [0, 0], sizes = [1, 64], strides = [1, 1]} : vector<1x256xf32> to vector<1x64xf32>
    %193 = vector.extract_strided_slice %191 {offsets = [0, 64], sizes = [1, 64], strides = [1, 1]} : vector<1x256xf32> to vector<1x64xf32>
    %194 = vector.extract_strided_slice %191 {offsets = [0, 128], sizes = [1, 64], strides = [1, 1]} : vector<1x256xf32> to vector<1x64xf32>
    %195 = vector.extract_strided_slice %191 {offsets = [0, 192], sizes = [1, 64], strides = [1, 1]} : vector<1x256xf32> to vector<1x64xf32>
    %196 = arith.mulf %193, %178 : vector<1x64xf32>
    %197 = arith.mulf %192, %194 : vector<1x64xf32>
    %198 = arith.addf %196, %197 : vector<1x64xf32>
    %199 = math.tanh %198 : vector<1x64xf32>
    %200 = arith.mulf %195, %199 : vector<1x64xf32>
    %201 = vector.extract_strided_slice %200 {offsets = [0, 32], sizes = [1, 32], strides = [1, 1]} : vector<1x64xf32> to vector<1x32xf32>
    %202 = tpu.concatenate %61, %81, %101, %121, %141, %161, %181, %201 in 0 : vector<1x32xf32>, vector<1x32xf32>, vector<1x32xf32>, vector<1x32xf32>, vector<1x32xf32>, vector<1x32xf32>, vector<1x32xf32>, vector<1x32xf32> -> vector<8x32xf32>
    %203 = arith.addf %202, %0 : vector<8x32xf32>
    %204 = arith.truncf %203 : vector<8x32xf32> to vector<8x32xbf16>
    %c0_36 = arith.constant 0 : index
    %c0_37 = arith.constant 0 : index
    %205 = vector.load %arg4[%c0_36, %c0_37] : memref<32x128xbf16, #tpu.memory_space<vmem>>, vector<32x128xbf16>
    %cst_38 = arith.constant dense<0.000000e+00> : vector<8x128xf32>
    %206 = tpu.matmul %204, %205, %cst_38 {dimension_numbers = #tpu.dot_dimension_numbers<[1], [0], [0], [1], [0, 0, 1, 1], [], []>} : vector<8x32xbf16>, vector<32x128xbf16>, vector<8x128xf32> -> vector<8x128xf32>
    %c0_39 = arith.constant 0 : index
    %c0_40 = arith.constant 0 : index
    %207 = vector.load %arg5[%c0_39, %c0_40] : memref<1x128xf32, #tpu.memory_space<vmem>>, vector<1x128xf32>
    %208 = vector.broadcast %207 : vector<1x128xf32> to vector<8x128xf32>
    %209 = arith.addf %206, %208 : vector<8x128xf32>
    %c0_41 = arith.constant 0 : index
    %c0_42 = arith.constant 0 : index
    %210 = vector.load %arg6[%c0_41, %c0_42] : memref<8x128xf32, #tpu.memory_space<vmem>>, vector<8x128xf32>
    tpu.vector_store %arg6[%c0_41, %c0_42], %209 {strides = array<i32>} : memref<8x128xf32, #tpu.memory_space<vmem>>, vector<8x128xf32>,
    return
  }
}

</mosaic_0001>

<llo_original>
// kernel: lstm_forward.1
$region0: #{lstm_forward.1}
  #allocation0 [shape = 'u32[]', space=smem, size = 0x4, offset = 0x4, fixed_abs, tag = 'smem constant byte address 0x4 - core index']
  #allocation1 [shape = 'u32[144,128]{1,0:T(1,128)}', space=vmem, size = 0x12000, scoped, tag = 'internal scratch']
  %s0 = inlined_call_operand.hbm [shape: f32[8,32], index: 0, kind: input, shape index: {}]
  %s1 = inlined_call_operand.hbm [shape: bf16[32,256], index: 1, kind: input, shape index: {}]
  %s2 = inlined_call_operand.vmem [shape: f32[1,256], index: 2, kind: input, shape index: {}]
  %s3 = inlined_call_operand.hbm [shape: bf16[64,256], index: 3, kind: input, shape index: {}]
  %s4 = inlined_call_operand.hbm [shape: bf16[32,128], index: 4, kind: input, shape index: {}]
  %s5 = inlined_call_operand.vmem [shape: f32[1,128], index: 5, kind: input, shape index: {}]
  %s6 = inlined_call_operand.hbm [shape: f32[8,128], index: 6, kind: output, shape index: {}]
  %s7 = sld [smem:[#allocation0]]
  $region50: #{lstm_forward.1} parent=0
    _
  %s9 = ssub.s32 1, %s7
  %s10 = scalar_select 0, %s9, %s7
  $region1: #{lstm_forward.1} parent=0
    #allocation2 [shape = 'u8[4096]{0}', space=vmem, size = 0x1000, scoped, tag = 'input window, operand 0, single buffered']
    #allocation3 [shape = 's32[1]{0}', space=sflag, size = 0x4, scoped, tag = 'scoped memory for lstm_forward.1']
    #allocation4 [shape = 's32[1]{0}', space=sflag, size = 0x4, scoped, tag = 'scoped memory for lstm_forward.1']
    #allocation5 [shape = 'u8[16384]{0}', space=vmem, size = 0x4000, scoped, tag = 'input window, operand 1, single buffered']
    #allocation6 [shape = 's32[1]{0}', space=sflag, size = 0x4, scoped, tag = 'scoped memory for lstm_forward.1']
    #allocation7 [shape = 'u8[32768]{0}', space=vmem, size = 0x8000, scoped, tag = 'input window, operand 3, single buffered']
    #allocation8 [shape = 'u8[8192]{0}', space=vmem, size = 0x2000, scoped, tag = 'input window, operand 4, single buffered']
    #allocation9 [shape = 's32[1]{0}', space=sflag, size = 0x4, scoped, tag = 'scoped memory for lstm_forward.1']
    #allocation10 [shape = 'u8[4096]{0}', space=vmem, size = 0x1000, scoped, tag = 'output window, operand 0, single buffered']
    %11 = vsyncpa [#allocation3], 0
    %12 = vsyncpa [#allocation6], 0
    %13 = vsyncpa [#allocation9], 0
    %14 = vsyncpa [#allocation4], 0
    // Predicated region
    $region2: #{lstm_forward.1} parent=1 // pred_check
      _
    $region3: #{lstm_forward.1} parent=1 // pred_check_branch
      %16 = sbr.rel (0) target = $region5
    $region4: #{lstm_forward.1} parent=1 // pred_region
      %s18 = ssub.s32 128, 128
      %19 = vsyncadd [#allocation3], %s18
      %s21 = sshll.u32 [#allocation2], 4
      %s22 = int_to_ptr.vmem [resolvable:$true] %s21
      %24 = dma.hbm_to_vmem [thread:$0]  %s0, 128, %s22, [#allocation3]
    $region5: #{lstm_forward.1} parent=1 // pred_fallthru
      _
    // Predicated region
    $region6: #{lstm_forward.1} parent=1 // pred_check
      _
    $region7: #{lstm_forward.1} parent=1 // pred_check_branch
      %26 = sbr.rel (0) target = $region9
    $region8: #{lstm_forward.1} parent=1 // pred_region
      %s28 = ssub.s32 512, 512
      %29 = vsyncadd [#allocation6], %s28
      %s30 = sshll.u32 [#allocation5], 4
      %s31 = int_to_ptr.vmem [resolvable:$true] %s30
      %36 = dma.hbm_to_vmem [thread:$0]  %s1, 512, %s31, [#allocation6], 128, 128, 8
    $region9: #{lstm_forward.1} parent=1 // pred_fallthru
      _
    // Predicated region
    $region10: #{lstm_forward.1} parent=1 // pred_check
      _
    $region11: #{lstm_forward.1} parent=1 // pred_check_branch
      %38 = sbr.rel (0) target = $region13
    $region12: #{lstm_forward.1} parent=1 // pred_region
      _
    $region13: #{lstm_forward.1} parent=1 // pred_fallthru
      _
    // Predicated region
    $region14: #{lstm_forward.1} parent=1 // pred_check
      _
    $region15: #{lstm_forward.1} parent=1 // pred_check_branch
      %40 = sbr.rel (0) target = $region17
    $region16: #{lstm_forward.1} parent=1 // pred_region
      %s42 = ssub.s32 1024, 1024
      %43 = vsyncadd [#allocation6], %s42
      %s44 = sshll.u32 [#allocation7], 4
      %s45 = int_to_ptr.vmem [resolvable:$true] %s44
      %50 = dma.hbm_to_vmem [thread:$0]  %s3, 1024, %s45, [#allocation6], 128, 128, 8
    $region17: #{lstm_forward.1} parent=1 // pred_fallthru
      _
    // Predicated region
    $region18: #{lstm_forward.1} parent=1 // pred_check
      _
    $region19: #{lstm_forward.1} parent=1 // pred_check_branch
      %52 = sbr.rel (0) target = $region21
    $region20: #{lstm_forward.1} parent=1 // pred_region
      %s54 = ssub.s32 256, 256
      %55 = vsyncadd [#allocation9], %s54
      %s56 = sshll.u32 [#allocation8], 4
      %s57 = int_to_ptr.vmem [resolvable:$true] %s56
      %62 = dma.hbm_to_vmem [thread:$0]  %s4, 256, %s57, [#allocation9], 64, 64, 4
    $region21: #{lstm_forward.1} parent=1 // pred_fallthru
      _
    // Predicated region
    $region22: #{lstm_forward.1} parent=1 // pred_check
      _
    $region23: #{lstm_forward.1} parent=1 // pred_check_branch
      %64 = sbr.rel (0) target = $region25
    $region24: #{lstm_forward.1} parent=1 // pred_region
      _
    $region25: #{lstm_forward.1} parent=1 // pred_fallthru
      _
    // Predicated region
    $region26: #{lstm_forward.1} parent=1 // pred_check
      _
    $region27: #{lstm_forward.1} parent=1 // pred_check_branch
      %66 = sbr.rel (0) target = $region29
    $region28: #{lstm_forward.1} parent=1 // pred_region
      %67 = dma.done [#allocation3], 128
    $region29: #{lstm_forward.1} parent=1 // pred_fallthru
      _
    // Predicated region
    $region30: #{lstm_forward.1} parent=1 // pred_check
      _
    $region31: #{lstm_forward.1} parent=1 // pred_check_branch
      %69 = sbr.rel (0) target = $region33
    $region32: #{lstm_forward.1} parent=1 // pred_region
      %70 = dma.done [#allocation6], 512
    $region33: #{lstm_forward.1} parent=1 // pred_fallthru
      _
    // Predicated region
    $region34: #{lstm_forward.1} parent=1 // pred_check
      _
    $region35: #{lstm_forward.1} parent=1 // pred_check_branch
      %72 = sbr.rel (0) target = $region37
    $region36: #{lstm_forward.1} parent=1 // pred_region
      %73 = dma.done [#allocation6], 1024
    $region37: #{lstm_forward.1} parent=1 // pred_fallthru
      _
    // Predicated region
    $region38: #{lstm_forward.1} parent=1 // pred_check
      _
    $region39: #{lstm_forward.1} parent=1 // pred_check_branch
      %75 = sbr.rel (0) target = $region41
    $region40: #{lstm_forward.1} parent=1 // pred_region
      %76 = dma.done [#allocation9], 256
    $region41: #{lstm_forward.1} parent=1 // pred_fallthru
      _
    %v78 = vld [vmem:[#allocation2] sm:$0xff]
    %v79 = vld [vmem:[#allocation7] sm:$0xff]
    %v80 = vld [vmem:[#allocation7 + $0x8] sm:$0xff]
    %v81 = vld [vmem:[#allocation7 + $0x10] sm:$0xff]
    %v82 = vld [vmem:[#allocation7 + $0x18] sm:$0xff]
    %v83 = vld [vmem:[#allocation7 + $0x20] sm:$0xff]
    %v84 = vld [vmem:[#allocation7 + $0x28] sm:$0xff]
    %v85 = vld [vmem:[#allocation7 + $0x30] sm:$0xff]
    %v86 = vld [vmem:[#allocation7 + $0x38] sm:$0xff]
    %v87 = vpack.c.bf16 %v78, %v78
    %v88 = vld [vmem:[#allocation5] sm:$0xff]
    %v89 = vld [vmem:[#allocation5 + $0x8] sm:$0xff]
    %v90 = vld [vmem:[#allocation5 + $0x10] sm:$0xff]
    %v91 = vld [vmem:[#allocation5 + $0x18] sm:$0xff]
    %v92 = vld [vmem:[%s2] sm:$0x3]
    %v94 = vlaneseq
    %v95 = vshrl.u32 %v94, 7
    %v96 = vsub.s32 0, %v95
    %v97 = vrot.slane %v92, %v96
    %v98 = vlaneseq
    %v99 = vshrl.u32 %v98, 7
    %v100 = vsub.s32 1, %v99
    %v101 = vrot.slane %v92, %v100
    %v108 = vunpack.c.l.b16 %v88
    %v109 = vunpack.c.h.b16 %v88
    %v110 = vunpack.c.l.b16 %v89
    %v111 = vunpack.c.h.b16 %v89
    %v112 = vunpack.c.l.b16 %v90
    %v113 = vunpack.c.h.b16 %v90
    %v114 = vunpack.c.l.b16 %v91
    %v115 = vunpack.c.h.b16 %v91
    %v116 = vpack.c.b16 %v110, %v108
    %v117 = vpack.c.b16 %v111, %v109
    %v118 = vpack.c.b16 %v114, %v112
    %v119 = vpack.c.b16 %v115, %v113
    %vm124 = vcmask 261120
    %v126 = vsel %vm124, %v87, 0
    %128 = vmatprep.subr.bf16.mxu0 0
    %129 = vmatpush1.bf16.msra.mxu0 0
    %130 = vmatprep.subr.bf16.mxu0 0
    %131 = vmatpush1.bf16.msra.mxu0 0
    %132 = vmatprep.subr.bf16.mxu0 0
    %133 = vmatpush1.bf16.msra.mxu0 0
    %134 = vmatprep.subr.bf16.mxu0 0
    %135 = vmatpush1.bf16.msra.mxu0 0
    %136 = vmatprep.subr.bf16.mxu0 0
    %137 = vmatpush1.bf16.msra.mxu0 0
    %138 = vmatprep.subr.bf16.mxu0 0
    %139 = vmatpush1.bf16.msra.mxu0 0
    %140 = vmatprep.subr.bf16.mxu0 %v119
    %141 = vmatpush1.bf16.msra.mxu0 %v118
    %142 = vmatprep.subr.bf16.mxu0 %v117
    %143 = vmatpush1.bf16.msra.mxu0 %v116
    %144 = vmatprep.subr.bf16.mxu0 0
    %145 = vmatpush2.bf16.msra.mxu0 0
    %146 = vmatprep.subr.bf16.mxu0 0
    %147 = vmatpush2.bf16.msra.mxu0 0
    %148 = vmatprep.subr.bf16.mxu0 0
    %149 = vmatpush2.bf16.msra.mxu0 0
    %150 = vmatprep.subr.bf16.mxu0 0
    %151 = vmatpush2.bf16.msra.mxu0 0
    %152 = vmatprep.subr.bf16.mxu0 0
    %153 = vmatpush2.bf16.msra.mxu0 0
    %154 = vmatprep.subr.bf16.mxu0 0
    %155 = vmatpush2.bf16.msra.mxu0 0
    %156 = vmatprep.subr.bf16.mxu0 0
    %157 = vmatpush2.bf16.msra.mxu0 0
    %158 = vmatprep.subr.bf16.mxu0 0
    %159 = vmatpush2.bf16.msra.mxu0 0
    %160 = vmatprep.mubr.bf16.mxu0 0
    %161 = vmatmul.mubr.bf16.gmra.mxu0 %v126
    %v162 = vpop.f32.mrf.mxu0
    %v163 = vadd.f32 %v97, %v162
    %v164 = vpop.f32.mrf.mxu0
    %v165 = vadd.f32 %v101, %v164
    %v166 = vpop.f32.mrf.mxu0
    %v167 = vpop.f32.mrf.mxu0
    %168 = vdwg.mxu0
    %v169 = vlaneseq
    %v170 = vand.u32 %v169, 127
    %v171 = vadd.s32 %v170, 128
    %vm172 = vcmp.ge.s32.totalorder %v170, 128
    %vm173 = vcmp.ge.s32.totalorder %v171, 128
    %vm174 = vcmp.lt.s32.totalorder %v170, 192
    %vm175 = vcmp.lt.s32.totalorder %v171, 192
    %vm176 = vmand %vm172, %vm174
    %vm177 = vmand %vm173, %vm175
    %vm178 = vcmp.lt.s32.totalorder %v170, 32
    %v179 = vsel %vm178, 1, 0
    %v180 = vcvt.s32.f32 %v179
    %v189 = vunpack.c.l.b16 %v79
    %v190 = vunpack.c.h.b16 %v79
    %v191 = vunpack.c.l.b16 %v80
    %v192 = vunpack.c.h.b16 %v80
    %v193 = vunpack.c.l.b16 %v81
    %v194 = vunpack.c.h.b16 %v81
    %v195 = vunpack.c.l.b16 %v82
    %v196 = vunpack.c.h.b16 %v82
    %v197 = vunpack.c.l.b16 %v83
    %v198 = vunpack.c.h.b16 %v83
    %v199 = vunpack.c.l.b16 %v84
    %v200 = vunpack.c.h.b16 %v84
    %v201 = vunpack.c.l.b16 %v85
    %v202 = vunpack.c.h.b16 %v85
    %v203 = vunpack.c.l.b16 %v86
    %v204 = vunpack.c.h.b16 %v86
    %v205 = vpack.c.b16 %v191, %v189
    %v206 = vpack.c.b16 %v192, %v190
    %v207 = vpack.c.b16 %v195, %v193
    %v208 = vpack.c.b16 %v196, %v194
    %v209 = vpack.c.b16 %v199, %v197
    %v210 = vpack.c.b16 %v200, %v198
    %v211 = vpack.c.b16 %v203, %v201
    %v212 = vpack.c.b16 %v204, %v202
    %vm221 = vcmask 523264
    %v223 = vsel %vm221, 0, 0
    %225 = vmatprep.subr.bf16.mxu0 0
    %226 = vmatpush1.bf16.msra.mxu0 0
    %227 = vmatprep.subr.bf16.mxu0 0
    %228 = vmatpush1.bf16.msra.mxu0 0
    %229 = vmatprep.subr.bf16.mxu0 0
    %230 = vmatpush1.bf16.msra.mxu0 0
    %231 = vmatprep.subr.bf16.mxu0 0
    %232 = vmatpush1.bf16.msra.mxu0 0
    %233 = vmatprep.subr.bf16.mxu0 %v212
    %234 = vmatpush1.bf16.msra.mxu0 %v211
    %235 = vmatprep.subr.bf16.mxu0 %v210
    %236 = vmatpush1.bf16.msra.mxu0 %v209
    %237 = vmatprep.subr.bf16.mxu0 %v208
    %238 = vmatpush1.bf16.msra.mxu0 %v207
    %239 = vmatprep.subr.bf16.mxu0 %v206
    %240 = vmatpush1.bf16.msra.mxu0 %v205
    %241 = vmatprep.subr.bf16.mxu0 0
    %242 = vmatpush2.bf16.msra.mxu0 0
    %243 = vmatprep.subr.bf16.mxu0 0
    %244 = vmatpush2.bf16.msra.mxu0 0
    %245 = vmatprep.subr.bf16.mxu0 0
    %246 = vmatpush2.bf16.msra.mxu0 0
    %247 = vmatprep.subr.bf16.mxu0 0
    %248 = vmatpush2.bf16.msra.mxu0 0
    %249 = vmatprep.subr.bf16.mxu0 0
    %250 = vmatpush2.bf16.msra.mxu0 0
    %251 = vmatprep.subr.bf16.mxu0 0
    %252 = vmatpush2.bf16.msra.mxu0 0
    %253 = vmatprep.subr.bf16.mxu0 0
    %254 = vmatpush2.bf16.msra.mxu0 0
    %255 = vmatprep.subr.bf16.mxu0 0
    %256 = vmatpush2.bf16.msra.mxu0 0
    %257 = vmatprep.mubr.bf16.mxu0 0
    %258 = vmatmul.mubr.bf16.gmra.mxu0 %v223
    %v259 = vpop.f32.mrf.mxu0
    %v260 = vadd.f32 %v163, %v259
    %v261 = vpop.f32.mrf.mxu0
    %v262 = vadd.f32 %v165, %v261
    %v263 = vpop.f32.mrf.mxu0
    %v264 = vpop.f32.mrf.mxu0
    %265 = vdwg.mxu0
    %v266 = vtanh.pop %v260
    %v267 = vtanh.pop %v262
    %v268 = vmul.f32 %v266, 0.5
    %v269 = vmul.f32 %v267, 0.5
    %v270 = vadd.f32 %v268, 0.5
    %v271 = vadd.f32 %v269, 0.5
    %v272 = vsel %vm176, %v266, %v270
    %v273 = vsel %vm177, %v267, %v271
    %v274 = vmul.f32 %v272, 0.0
    %v275 = vmul.f32 %v272, %v273
    %277 = vrot.lane.b32.xlu0 %v275, 64
    %v278 = vpop.permute.xlu0 %277
    %v280 = vadd.f32 %v274, %v278
    %v281 = vtanh.pop %v280
    %v282 = vmul.f32 %v273, %v281
    %284 = vrot.lane.b32.xlu0 %v180, 64
    %v285 = vpop.permute.xlu0 %284
    %v287 = vmul.f32 %v282, %v285
    %v288 = vmul.f32 %v280, %v285
    %v289 = vpack.c.bf16 %v287, %v287
    %291 = vrot.lane.b32.xlu0 %v289, 64
    %v292 = vpop.permute.xlu0 %291
    %v295 = vrot.slane %v163, 1
    %v296 = vrot.slane %v165, 1
    %v300 = vsel %vm221, %v292, 0
    %302 = vmatprep.subr.bf16.mxu0 0
    %303 = vmatpush1.bf16.msra.mxu0 0
    %304 = vmatprep.subr.bf16.mxu0 0
    %305 = vmatpush1.bf16.msra.mxu0 0
    %306 = vmatprep.subr.bf16.mxu0 0
    %307 = vmatpush1.bf16.msra.mxu0 0
    %308 = vmatprep.subr.bf16.mxu0 0
    %309 = vmatpush1.bf16.msra.mxu0 0
    %310 = vmatprep.subr.bf16.mxu0 %v212
    %311 = vmatpush1.bf16.msra.mxu0 %v211
    %312 = vmatprep.subr.bf16.mxu0 %v210
    %313 = vmatpush1.bf16.msra.mxu0 %v209
    %314 = vmatprep.subr.bf16.mxu0 %v208
    %315 = vmatpush1.bf16.msra.mxu0 %v207
    %316 = vmatprep.subr.bf16.mxu0 %v206
    %317 = vmatpush1.bf16.msra.mxu0 %v205
    %318 = vmatprep.subr.bf16.mxu0 0
    %319 = vmatpush2.bf16.msra.mxu0 0
    %320 = vmatprep.subr.bf16.mxu0 0
    %321 = vmatpush2.bf16.msra.mxu0 0
    %322 = vmatprep.subr.bf16.mxu0 0
    %323 = vmatpush2.bf16.msra.mxu0 0
    %324 = vmatprep.subr.bf16.mxu0 0
    %325 = vmatpush2.bf16.msra.mxu0 0
    %326 = vmatprep.subr.bf16.mxu0 0
    %327 = vmatpush2.bf16.msra.mxu0 0
    %328 = vmatprep.subr.bf16.mxu0 0
    %329 = vmatpush2.bf16.msra.mxu0 0
    %330 = vmatprep.subr.bf16.mxu0 0
    %331 = vmatpush2.bf16.msra.mxu0 0
    %332 = vmatprep.subr.bf16.mxu0 0
    %333 = vmatpush2.bf16.msra.mxu0 0
    %334 = vmatprep.mubr.bf16.mxu0 0
    %335 = vmatmul.mubr.bf16.gmra.mxu0 %v300
    %v336 = vpop.f32.mrf.mxu0
    %v337 = vadd.f32 %v295, %v336
    %v338 = vpop.f32.mrf.mxu0
    %v339 = vadd.f32 %v296, %v338
    %v340 = vpop.f32.mrf.mxu0
    %v341 = vpop.f32.mrf.mxu0
    %342 = vdwg.mxu0
    %v343 = vtanh.pop %v337
    %v344 = vtanh.pop %v339
    %v345 = vmul.f32 %v343, 0.5
    %v346 = vmul.f32 %v344, 0.5
    %v347 = vadd.f32 %v345, 0.5
    %v348 = vadd.f32 %v346, 0.5
    %v349 = vsel %vm176, %v343, %v347
    %v350 = vsel %vm177, %v344, %v348
    %v351 = vmul.f32 %v349, %v288
    %v352 = vmul.f32 %v349, %v350
    %354 = vrot.lane.b32.xlu0 %v352, 64
    %v355 = vpop.permute.xlu0 %354
    %v357 = vadd.f32 %v351, %v355
    %v358 = vtanh.pop %v357
    %v359 = vmul.f32 %v350, %v358
    %v360 = vpack.c.bf16 %v359, %v359
    %362 = vrot.lane.b32.xlu0 %v360, 64
    %v363 = vpop.permute.xlu0 %362
    %v364 = vrot.slane %v163, 2
    %v365 = vrot.slane %v165, 2
    %v369 = vsel %vm221, %v363, 0
    %371 = vmatprep.subr.bf16.mxu0 0
    %372 = vmatpush1.bf16.msra.mxu0 0
    %373 = vmatprep.subr.bf16.mxu0 0
    %374 = vmatpush1.bf16.msra.mxu0 0
    %375 = vmatprep.subr.bf16.mxu0 0
    %376 = vmatpush1.bf16.msra.mxu0 0
    %377 = vmatprep.subr.bf16.mxu0 0
    %378 = vmatpush1.bf16.msra.mxu0 0
    %379 = vmatprep.subr.bf16.mxu0 %v212
    %380 = vmatpush1.bf16.msra.mxu0 %v211
    %381 = vmatprep.subr.bf16.mxu0 %v210
    %382 = vmatpush1.bf16.msra.mxu0 %v209
    %383 = vmatprep.subr.bf16.mxu0 %v208
    %384 = vmatpush1.bf16.msra.mxu0 %v207
    %385 = vmatprep.subr.bf16.mxu0 %v206
    %386 = vmatpush1.bf16.msra.mxu0 %v205
    %387 = vmatprep.subr.bf16.mxu0 0
    %388 = vmatpush2.bf16.msra.mxu0 0
    %389 = vmatprep.subr.bf16.mxu0 0
    %390 = vmatpush2.bf16.msra.mxu0 0
    %391 = vmatprep.subr.bf16.mxu0 0
    %392 = vmatpush2.bf16.msra.mxu0 0
    %393 = vmatprep.subr.bf16.mxu0 0
    %394 = vmatpush2.bf16.msra.mxu0 0
    %395 = vmatprep.subr.bf16.mxu0 0
    %396 = vmatpush2.bf16.msra.mxu0 0
    %397 = vmatprep.subr.bf16.mxu0 0
    %398 = vmatpush2.bf16.msra.mxu0 0
    %399 = vmatprep.subr.bf16.mxu0 0
    %400 = vmatpush2.bf16.msra.mxu0 0
    %401 = vmatprep.subr.bf16.mxu0 0
    %402 = vmatpush2.bf16.msra.mxu0 0
    %403 = vmatprep.mubr.bf16.mxu0 0
    %404 = vmatmul.mubr.bf16.gmra.mxu0 %v369
    %v405 = vpop.f32.mrf.mxu0
    %v406 = vadd.f32 %v364, %v405
    %v407 = vpop.f32.mrf.mxu0
    %v408 = vadd.f32 %v365, %v407
    %v409 = vpop.f32.mrf.mxu0
    %v410 = vpop.f32.mrf.mxu0
    %411 = vdwg.mxu0
    %v412 = vtanh.pop %v406
    %v413 = vtanh.pop %v408
    %v414 = vmul.f32 %v412, 0.5
    %v415 = vmul.f32 %v413, 0.5
    %v416 = vadd.f32 %v414, 0.5
    %v417 = vadd.f32 %v415, 0.5
    %v418 = vsel %vm176, %v412, %v416
    %v419 = vsel %vm177, %v413, %v417
    %v420 = vmul.f32 %v418, %v357
    %v421 = vmul.f32 %v418, %v419
    %423 = vrot.lane.b32.xlu0 %v421, 64
    %v424 = vpop.permute.xlu0 %423
    %v426 = vadd.f32 %v420, %v424
    %v427 = vtanh.pop %v426
    %v428 = vmul.f32 %v419, %v427
    %v429 = vpack.c.bf16 %v428, %v428
    %431 = vrot.lane.b32.xlu0 %v429, 64
    %v432 = vpop.permute.xlu0 %431
    %v433 = vrot.slane %v163, 3
    %v434 = vrot.slane %v165, 3
    %v438 = vsel %vm221, %v432, 0
    %440 = vmatprep.subr.bf16.mxu0 0
    %441 = vmatpush1.bf16.msra.mxu0 0
    %442 = vmatprep.subr.bf16.mxu0 0
    %443 = vmatpush1.bf16.msra.mxu0 0
    %444 = vmatprep.subr.bf16.mxu0 0
    %445 = vmatpush1.bf16.msra.mxu0 0
    %446 = vmatprep.subr.bf16.mxu0 0
    %447 = vmatpush1.bf16.msra.mxu0 0
    %448 = vmatprep.subr.bf16.mxu0 %v212
    %449 = vmatpush1.bf16.msra.mxu0 %v211
    %450 = vmatprep.subr.bf16.mxu0 %v210
    %451 = vmatpush1.bf16.msra.mxu0 %v209
    %452 = vmatprep.subr.bf16.mxu0 %v208
    %453 = vmatpush1.bf16.msra.mxu0 %v207
    %454 = vmatprep.subr.bf16.mxu0 %v206
    %455 = vmatpush1.bf16.msra.mxu0 %v205
    %456 = vmatprep.subr.bf16.mxu0 0
    %457 = vmatpush2.bf16.msra.mxu0 0
    %458 = vmatprep.subr.bf16.mxu0 0
    %459 = vmatpush2.bf16.msra.mxu0 0
    %460 = vmatprep.subr.bf16.mxu0 0
    %461 = vmatpush2.bf16.msra.mxu0 0
    %462 = vmatprep.subr.bf16.mxu0 0
    %463 = vmatpush2.bf16.msra.mxu0 0
    %464 = vmatprep.subr.bf16.mxu0 0
    %465 = vmatpush2.bf16.msra.mxu0 0
    %466 = vmatprep.subr.bf16.mxu0 0
    %467 = vmatpush2.bf16.msra.mxu0 0
    %468 = vmatprep.subr.bf16.mxu0 0
    %469 = vmatpush2.bf16.msra.mxu0 0
    %470 = vmatprep.subr.bf16.mxu0 0
    %471 = vmatpush2.bf16.msra.mxu0 0
    %472 = vmatprep.mubr.bf16.mxu0 0
    %473 = vmatmul.mubr.bf16.gmra.mxu0 %v438
    %v474 = vpop.f32.mrf.mxu0
    %v475 = vadd.f32 %v433, %v474
    %v476 = vpop.f32.mrf.mxu0
    %v477 = vadd.f32 %v434, %v476
    %v478 = vpop.f32.mrf.mxu0
    %v479 = vpop.f32.mrf.mxu0
    %480 = vdwg.mxu0
    %v481 = vtanh.pop %v475
    %v482 = vtanh.pop %v477
    %v483 = vmul.f32 %v481, 0.5
    %v484 = vmul.f32 %v482, 0.5
    %v485 = vadd.f32 %v483, 0.5
    %v486 = vadd.f32 %v484, 0.5
    %v487 = vsel %vm176, %v481, %v485
    %v488 = vsel %vm177, %v482, %v486
    %v489 = vmul.f32 %v487, %v426
    %v490 = vmul.f32 %v487, %v488
    %492 = vrot.lane.b32.xlu0 %v490, 64
    %v493 = vpop.permute.xlu0 %492
    %v495 = vadd.f32 %v489, %v493
    %v496 = vtanh.pop %v495
    %v497 = vmul.f32 %v488, %v496
    %v498 = vpack.c.bf16 %v497, %v497
    %500 = vrot.lane.b32.xlu0 %v498, 64
    %v501 = vpop.permute.xlu0 %500
    %v502 = vrot.slane %v163, 4
    %v503 = vrot.slane %v165, 4
    %v507 = vsel %vm221, %v501, 0
    %509 = vmatprep.subr.bf16.mxu0 0
    %510 = vmatpush1.bf16.msra.mxu0 0
    %511 = vmatprep.subr.bf16.mxu0 0
    %512 = vmatpush1.bf16.msra.mxu0 0
    %513 = vmatprep.subr.bf16.mxu0 0
    %514 = vmatpush1.bf16.msra.mxu0 0
    %515 = vmatprep.subr.bf16.mxu0 0
    %516 = vmatpush1.bf16.msra.mxu0 0
    %517 = vmatprep.subr.bf16.mxu0 %v212
    %518 = vmatpush1.bf16.msra.mxu0 %v211
    %519 = vmatprep.subr.bf16.mxu0 %v210
    %520 = vmatpush1.bf16.msra.mxu0 %v209
    %521 = vmatprep.subr.bf16.mxu0 %v208
    %522 = vmatpush1.bf16.msra.mxu0 %v207
    %523 = vmatprep.subr.bf16.mxu0 %v206
    %524 = vmatpush1.bf16.msra.mxu0 %v205
    %525 = vmatprep.subr.bf16.mxu0 0
    %526 = vmatpush2.bf16.msra.mxu0 0
    %527 = vmatprep.subr.bf16.mxu0 0
    %528 = vmatpush2.bf16.msra.mxu0 0
    %529 = vmatprep.subr.bf16.mxu0 0
    %530 = vmatpush2.bf16.msra.mxu0 0
    %531 = vmatprep.subr.bf16.mxu0 0
    %532 = vmatpush2.bf16.msra.mxu0 0
    %533 = vmatprep.subr.bf16.mxu0 0
    %534 = vmatpush2.bf16.msra.mxu0 0
    %535 = vmatprep.subr.bf16.mxu0 0
    %536 = vmatpush2.bf16.msra.mxu0 0
    %537 = vmatprep.subr.bf16.mxu0 0
    %538 = vmatpush2.bf16.msra.mxu0 0
    %539 = vmatprep.subr.bf16.mxu0 0
    %540 = vmatpush2.bf16.msra.mxu0 0
    %541 = vmatprep.mubr.bf16.mxu0 0
    %542 = vmatmul.mubr.bf16.gmra.mxu0 %v507
    %v543 = vpop.f32.mrf.mxu0
    %v544 = vadd.f32 %v502, %v543
    %v545 = vpop.f32.mrf.mxu0
    %v546 = vadd.f32 %v503, %v545
    %v547 = vpop.f32.mrf.mxu0
    %v548 = vpop.f32.mrf.mxu0
    %549 = vdwg.mxu0
    %v550 = vtanh.pop %v544
    %v551 = vtanh.pop %v546
    %v552 = vmul.f32 %v550, 0.5
    %v553 = vmul.f32 %v551, 0.5
    %v554 = vadd.f32 %v552, 0.5
    %v555 = vadd.f32 %v553, 0.5
    %v556 = vsel %vm176, %v550, %v554
    %v557 = vsel %vm177, %v551, %v555
    %v558 = vmul.f32 %v556, %v495
    %v559 = vmul.f32 %v556, %v557
    %561 = vrot.lane.b32.xlu0 %v559, 64
    %v562 = vpop.permute.xlu0 %561
    %v564 = vadd.f32 %v558, %v562
    %v565 = vtanh.pop %v564
    %v566 = vmul.f32 %v557, %v565
    %v567 = vpack.c.bf16 %v566, %v566
    %569 = vrot.lane.b32.xlu0 %v567, 64
    %v570 = vpop.permute.xlu0 %569
    %v571 = vrot.slane %v163, 5
    %v572 = vrot.slane %v165, 5
    %v576 = vsel %vm221, %v570, 0
    %578 = vmatprep.subr.bf16.mxu0 0
    %579 = vmatpush1.bf16.msra.mxu0 0
    %580 = vmatprep.subr.bf16.mxu0 0
    %581 = vmatpush1.bf16.msra.mxu0 0
    %582 = vmatprep.subr.bf16.mxu0 0
    %583 = vmatpush1.bf16.msra.mxu0 0
    %584 = vmatprep.subr.bf16.mxu0 0
    %585 = vmatpush1.bf16.msra.mxu0 0
    %586 = vmatprep.subr.bf16.mxu0 %v212
    %587 = vmatpush1.bf16.msra.mxu0 %v211
    %588 = vmatprep.subr.bf16.mxu0 %v210
    %589 = vmatpush1.bf16.msra.mxu0 %v209
    %590 = vmatprep.subr.bf16.mxu0 %v208
    %591 = vmatpush1.bf16.msra.mxu0 %v207
    %592 = vmatprep.subr.bf16.mxu0 %v206
    %593 = vmatpush1.bf16.msra.mxu0 %v205
    %594 = vmatprep.subr.bf16.mxu0 0
    %595 = vmatpush2.bf16.msra.mxu0 0
    %596 = vmatprep.subr.bf16.mxu0 0
    %597 = vmatpush2.bf16.msra.mxu0 0
    %598 = vmatprep.subr.bf16.mxu0 0
    %599 = vmatpush2.bf16.msra.mxu0 0
    %600 = vmatprep.subr.bf16.mxu0 0
    %601 = vmatpush2.bf16.msra.mxu0 0
    %602 = vmatprep.subr.bf16.mxu0 0
    %603 = vmatpush2.bf16.msra.mxu0 0
    %604 = vmatprep.subr.bf16.mxu0 0
    %605 = vmatpush2.bf16.msra.mxu0 0
    %606 = vmatprep.subr.bf16.mxu0 0
    %607 = vmatpush2.bf16.msra.mxu0 0
    %608 = vmatprep.subr.bf16.mxu0 0
    %609 = vmatpush2.bf16.msra.mxu0 0
    %610 = vmatprep.mubr.bf16.mxu0 0
    %611 = vmatmul.mubr.bf16.gmra.mxu0 %v576
    %v612 = vpop.f32.mrf.mxu0
    %v613 = vadd.f32 %v571, %v612
    %v614 = vpop.f32.mrf.mxu0
    %v615 = vadd.f32 %v572, %v614
    %v616 = vpop.f32.mrf.mxu0
    %v617 = vpop.f32.mrf.mxu0
    %618 = vdwg.mxu0
    %v619 = vtanh.pop %v613
    %v620 = vtanh.pop %v615
    %v621 = vmul.f32 %v619, 0.5
    %v622 = vmul.f32 %v620, 0.5
    %v623 = vadd.f32 %v621, 0.5
    %v624 = vadd.f32 %v622, 0.5
    %v625 = vsel %vm176, %v619, %v623
    %v626 = vsel %vm177, %v620, %v624
    %v627 = vmul.f32 %v625, %v564
    %v628 = vmul.f32 %v625, %v626
    %630 = vrot.lane.b32.xlu0 %v628, 64
    %v631 = vpop.permute.xlu0 %630
    %v633 = vadd.f32 %v627, %v631
    %v634 = vtanh.pop %v633
    %v635 = vmul.f32 %v626, %v634
    %v636 = vpack.c.bf16 %v635, %v635
    %638 = vrot.lane.b32.xlu0 %v636, 64
    %v639 = vpop.permute.xlu0 %638
    %v640 = vrot.slane %v163, 6
    %v641 = vrot.slane %v165, 6
    %v645 = vsel %vm221, %v639, 0
    %647 = vmatprep.subr.bf16.mxu0 0
    %648 = vmatpush1.bf16.msra.mxu0 0
    %649 = vmatprep.subr.bf16.mxu0 0
    %650 = vmatpush1.bf16.msra.mxu0 0
    %651 = vmatprep.subr.bf16.mxu0 0
    %652 = vmatpush1.bf16.msra.mxu0 0
    %653 = vmatprep.subr.bf16.mxu0 0
    %654 = vmatpush1.bf16.msra.mxu0 0
    %655 = vmatprep.subr.bf16.mxu0 %v212
    %656 = vmatpush1.bf16.msra.mxu0 %v211
    %657 = vmatprep.subr.bf16.mxu0 %v210
    %658 = vmatpush1.bf16.msra.mxu0 %v209
    %659 = vmatprep.subr.bf16.mxu0 %v208
    %660 = vmatpush1.bf16.msra.mxu0 %v207
    %661 = vmatprep.subr.bf16.mxu0 %v206
    %662 = vmatpush1.bf16.msra.mxu0 %v205
    %663 = vmatprep.subr.bf16.mxu0 0
    %664 = vmatpush2.bf16.msra.mxu0 0
    %665 = vmatprep.subr.bf16.mxu0 0
    %666 = vmatpush2.bf16.msra.mxu0 0
    %667 = vmatprep.subr.bf16.mxu0 0
    %668 = vmatpush2.bf16.msra.mxu0 0
    %669 = vmatprep.subr.bf16.mxu0 0
    %670 = vmatpush2.bf16.msra.mxu0 0
    %671 = vmatprep.subr.bf16.mxu0 0
    %672 = vmatpush2.bf16.msra.mxu0 0
    %673 = vmatprep.subr.bf16.mxu0 0
    %674 = vmatpush2.bf16.msra.mxu0 0
    %675 = vmatprep.subr.bf16.mxu0 0
    %676 = vmatpush2.bf16.msra.mxu0 0
    %677 = vmatprep.subr.bf16.mxu0 0
    %678 = vmatpush2.bf16.msra.mxu0 0
    %679 = vmatprep.mubr.bf16.mxu0 0
    %680 = vmatmul.mubr.bf16.gmra.mxu0 %v645
    %v681 = vpop.f32.mrf.mxu0
    %v682 = vadd.f32 %v640, %v681
    %v683 = vpop.f32.mrf.mxu0
    %v684 = vadd.f32 %v641, %v683
    %v685 = vpop.f32.mrf.mxu0
    %v686 = vpop.f32.mrf.mxu0
    %687 = vdwg.mxu0
    %v688 = vtanh.pop %v682
    %v689 = vtanh.pop %v684
    %v690 = vmul.f32 %v688, 0.5
    %v691 = vmul.f32 %v689, 0.5
    %v692 = vadd.f32 %v690, 0.5
    %v693 = vadd.f32 %v691, 0.5
    %v694 = vsel %vm176, %v688, %v692
    %v695 = vsel %vm177, %v689, %v693
    %v696 = vmul.f32 %v694, %v633
    %v697 = vmul.f32 %v694, %v695
    %699 = vrot.lane.b32.xlu0 %v697, 64
    %v700 = vpop.permute.xlu0 %699
    %v702 = vadd.f32 %v696, %v700
    %v703 = vtanh.pop %v702
    %v704 = vmul.f32 %v695, %v703
    %v705 = vpack.c.bf16 %v704, %v704
    %707 = vrot.lane.b32.xlu0 %v705, 64
    %v708 = vpop.permute.xlu0 %707
    %v709 = vrot.slane %v163, 7
    %v710 = vrot.slane %v165, 7
    %v714 = vsel %vm221, %v708, 0
    %716 = vmatprep.subr.bf16.mxu0 0
    %717 = vmatpush1.bf16.msra.mxu0 0
    %718 = vmatprep.subr.bf16.mxu0 0
    %719 = vmatpush1.bf16.msra.mxu0 0
    %720 = vmatprep.subr.bf16.mxu0 0
    %721 = vmatpush1.bf16.msra.mxu0 0
    %722 = vmatprep.subr.bf16.mxu0 0
    %723 = vmatpush1.bf16.msra.mxu0 0
    %724 = vmatprep.subr.bf16.mxu0 %v212
    %725 = vmatpush1.bf16.msra.mxu0 %v211
    %726 = vmatprep.subr.bf16.mxu0 %v210
    %727 = vmatpush1.bf16.msra.mxu0 %v209
    %728 = vmatprep.subr.bf16.mxu0 %v208
    %729 = vmatpush1.bf16.msra.mxu0 %v207
    %730 = vmatprep.subr.bf16.mxu0 %v206
    %731 = vmatpush1.bf16.msra.mxu0 %v205
    %732 = vmatprep.subr.bf16.mxu0 0
    %733 = vmatpush2.bf16.msra.mxu0 0
    %734 = vmatprep.subr.bf16.mxu0 0
    %735 = vmatpush2.bf16.msra.mxu0 0
    %736 = vmatprep.subr.bf16.mxu0 0
    %737 = vmatpush2.bf16.msra.mxu0 0
    %738 = vmatprep.subr.bf16.mxu0 0
    %739 = vmatpush2.bf16.msra.mxu0 0
    %740 = vmatprep.subr.bf16.mxu0 0
    %741 = vmatpush2.bf16.msra.mxu0 0
    %742 = vmatprep.subr.bf16.mxu0 0
    %743 = vmatpush2.bf16.msra.mxu0 0
    %744 = vmatprep.subr.bf16.mxu0 0
    %745 = vmatpush2.bf16.msra.mxu0 0
    %746 = vmatprep.subr.bf16.mxu0 0
    %747 = vmatpush2.bf16.msra.mxu0 0
    %748 = vmatprep.mubr.bf16.mxu0 0
    %749 = vmatmul.mubr.bf16.gmra.mxu0 %v714
    %v750 = vpop.f32.mrf.mxu0
    %v751 = vadd.f32 %v709, %v750
    %v752 = vpop.f32.mrf.mxu0
    %v753 = vadd.f32 %v710, %v752
    %v754 = vpop.f32.mrf.mxu0
    %v755 = vpop.f32.mrf.mxu0
    %756 = vdwg.mxu0
    %v757 = vtanh.pop %v751
    %v758 = vtanh.pop %v753
    %v759 = vmul.f32 %v757, 0.5
    %v760 = vmul.f32 %v758, 0.5
    %v761 = vadd.f32 %v759, 0.5
    %v762 = vadd.f32 %v760, 0.5
    %v763 = vsel %vm176, %v757, %v761
    %v764 = vsel %vm177, %v758, %v762
    %v765 = vmul.f32 %v763, %v702
    %v766 = vmul.f32 %v763, %v764
    %768 = vrot.lane.b32.xlu0 %v766, 64
    %v769 = vpop.permute.xlu0 %768
    %v771 = vadd.f32 %v765, %v769
    %v772 = vtanh.pop %v771
    %v773 = vmul.f32 %v764, %v772
    %v774 = vpack.c.bf16 %v773, %v773
    %776 = vrot.lane.b32.xlu0 %v774, 64
    %v777 = vpop.permute.xlu0 %776
    %v779 = vsel %vm221, %v777, 0
    %781 = vmatprep.subr.bf16.mxu0 0
    %782 = vmatpush1.bf16.msra.mxu0 0
    %783 = vmatprep.subr.bf16.mxu0 0
    %784 = vmatpush1.bf16.msra.mxu0 0
    %785 = vmatprep.subr.bf16.mxu0 0
    %786 = vmatpush1.bf16.msra.mxu0 0
    %787 = vmatprep.subr.bf16.mxu0 0
    %788 = vmatpush1.bf16.msra.mxu0 0
    %789 = vmatprep.subr.bf16.mxu0 %v212
    %790 = vmatpush1.bf16.msra.mxu0 %v211
    %791 = vmatprep.subr.bf16.mxu0 %v210
    %792 = vmatpush1.bf16.msra.mxu0 %v209
    %793 = vmatprep.subr.bf16.mxu0 %v208
    %794 = vmatpush1.bf16.msra.mxu0 %v207
    %795 = vmatprep.subr.bf16.mxu0 %v206
    %796 = vmatpush1.bf16.msra.mxu0 %v205
    %797 = vmatprep.subr.bf16.mxu0 0
    %798 = vmatpush2.bf16.msra.mxu0 0
    %799 = vmatprep.subr.bf16.mxu0 0
    %800 = vmatpush2.bf16.msra.mxu0 0
    %801 = vmatprep.subr.bf16.mxu0 0
    %802 = vmatpush2.bf16.msra.mxu0 0
    %803 = vmatprep.subr.bf16.mxu0 0
    %804 = vmatpush2.bf16.msra.mxu0 0
    %805 = vmatprep.subr.bf16.mxu0 0
    %806 = vmatpush2.bf16.msra.mxu0 0
    %807 = vmatprep.subr.bf16.mxu0 0
    %808 = vmatpush2.bf16.msra.mxu0 0
    %809 = vmatprep.subr.bf16.mxu0 0
    %810 = vmatpush2.bf16.msra.mxu0 0
    %811 = vmatprep.subr.bf16.mxu0 0
    %812 = vmatpush2.bf16.msra.mxu0 0
    %813 = vmatprep.mubr.bf16.mxu0 0
    %814 = vmatmul.mubr.bf16.gmra.mxu0 %v779
    %v815 = vpop.f32.mrf.mxu0
    %v816 = vadd.f32 %v709, %v815
    %v817 = vpop.f32.mrf.mxu0
    %v818 = vadd.f32 %v710, %v817
    %v819 = vpop.f32.mrf.mxu0
    %v820 = vpop.f32.mrf.mxu0
    %821 = vdwg.mxu0
    %v822 = vtanh.pop %v816
    %v823 = vtanh.pop %v818
    %v824 = vmul.f32 %v822, 0.5
    %v825 = vmul.f32 %v823, 0.5
    %v826 = vadd.f32 %v824, 0.5
    %v827 = vadd.f32 %v825, 0.5
    %v828 = vsel %vm176, %v822, %v826
    %v829 = vsel %vm177, %v823, %v827
    %v830 = vmul.f32 %v828, %v771
    %v831 = vmul.f32 %v828, %v829
    %833 = vrot.lane.b32.xlu0 %v831, 64
    %v834 = vpop.permute.xlu0 %833
    %v836 = vadd.f32 %v830, %v834
    %v837 = vtanh.pop %v836
    %v838 = vmul.f32 %v829, %v837
    %v840 = vrot.slane %v428, 7
    %v843 = vrot.slane %v497, 6
    %v846 = vrot.slane %v566, 5
    %v849 = vrot.slane %v635, 4
    %v852 = vrot.slane %v704, 3
    %v855 = vrot.slane %v773, 2
    %v858 = vrot.slane %v838, 1
    %vm860 = vcmask 1040384
    %v861 = vsel %vm860, %v359, %v840
    %vm862 = vcmask 1041408
    %v863 = vsel %vm862, %v861, %v843
    %vm864 = vcmask 1042432
    %v865 = vsel %vm864, %v863, %v846
    %vm866 = vcmask 1043456
    %v867 = vsel %vm866, %v865, %v849
    %vm868 = vcmask 1044480
    %v869 = vsel %vm868, %v867, %v852
    %vm870 = vcmask 1045504
    %v871 = vsel %vm870, %v869, %v855
    %vm872 = vcmask 1046528
    %v873 = vsel %vm872, %v871, %v858
    %875 = vrot.lane.b32.xlu0 %v78, 96
    %v876 = vpop.permute.xlu0 %875
    %v878 = vadd.f32 %v873, %v876
    %v879 = vpack.c.bf16 %v878, %v878
    %v880 = vld [vmem:[#allocation8] sm:$0xf]
    %v881 = vld [vmem:[#allocation8 + $0x4] sm:$0xf]
    %v882 = vld [vmem:[#allocation8 + $0x8] sm:$0xf]
    %v883 = vld [vmem:[#allocation8 + $0xc] sm:$0xf]
    %v884 = vld [vmem:[%s5] sm:$0x1]
    %v886 = vlaneseq
    %v887 = vshrl.u32 %v886, 7
    %v888 = vsub.s32 0, %v887
    %v889 = vrot.slane %v884, %v888
    %892 = vrot.lane.b32.xlu0 %v879, 32
    %v893 = vpop.permute.xlu0 %892
    %v898 = vunpack.c.l.b16 %v880
    %v899 = vunpack.c.l.b16 %v881
    %v900 = vunpack.c.l.b16 %v882
    %v901 = vunpack.c.l.b16 %v883
    %v902 = vpack.c.b16 %v899, %v898
    %v903 = vpack.c.b16 %v901, %v900
    %v907 = vsel %vm124, %v893, 0
    %909 = vmatprep.subr.bf16.mxu0 0
    %910 = vmatpush1.bf16.msra.mxu0 0
    %911 = vmatprep.subr.bf16.mxu0 0
    %912 = vmatpush1.bf16.msra.mxu0 0
    %913 = vmatprep.subr.bf16.mxu0 0
    %914 = vmatpush1.bf16.msra.mxu0 0
    %915 = vmatprep.subr.bf16.mxu0 0
    %916 = vmatpush1.bf16.msra.mxu0 0
    %917 = vmatprep.subr.bf16.mxu0 0
    %918 = vmatpush1.bf16.msra.mxu0 0
    %919 = vmatprep.subr.bf16.mxu0 0
    %920 = vmatpush1.bf16.msra.mxu0 0
    %921 = vmatprep.subr.bf16.mxu0 0
    %922 = vmatpush1.bf16.msra.mxu0 %v903
    %923 = vmatprep.subr.bf16.mxu0 0
    %924 = vmatpush1.bf16.msra.mxu0 %v902
    %925 = vmatprep.subr.bf16.mxu0 0
    %926 = vmatpush2.bf16.msra.mxu0 0
    %927 = vmatprep.subr.bf16.mxu0 0
    %928 = vmatpush2.bf16.msra.mxu0 0
    %929 = vmatprep.subr.bf16.mxu0 0
    %930 = vmatpush2.bf16.msra.mxu0 0
    %931 = vmatprep.subr.bf16.mxu0 0
    %932 = vmatpush2.bf16.msra.mxu0 0
    %933 = vmatprep.subr.bf16.mxu0 0
    %934 = vmatpush2.bf16.msra.mxu0 0
    %935 = vmatprep.subr.bf16.mxu0 0
    %936 = vmatpush2.bf16.msra.mxu0 0
    %937 = vmatprep.subr.bf16.mxu0 0
    %938 = vmatpush2.bf16.msra.mxu0 0
    %939 = vmatprep.subr.bf16.mxu0 0
    %940 = vmatpush2.bf16.msra.mxu0 0
    %941 = vmatprep.mubr.bf16.mxu0 0
    %942 = vmatmul.mubr.bf16.gmra.mxu0 %v907
    %v943 = vpop.f32.mrf.mxu0
    %v944 = vadd.f32 %v889, %v943
    %v945 = vpop.f32.mrf.mxu0
    %v946 = vpop.f32.mrf.mxu0
    %v947 = vpop.f32.mrf.mxu0
    %948 = vdwg.mxu0
    %949 = vst [vmem:[#allocation10] sm:$0xff] %v944
    // Predicated region
    $region42: #{lstm_forward.1} parent=1 // pred_check
      _
    $region43: #{lstm_forward.1} parent=1 // pred_check_branch
      %951 = sbr.rel (0) target = $region45
    $region44: #{lstm_forward.1} parent=1 // pred_region
      %s953 = ssub.s32 128, 128
      %954 = vsyncadd [#allocation4], %s953
      %s956 = sshll.u32 [#allocation10], 4
      %s957 = int_to_ptr.vmem [resolvable:$true] %s956
      %959 = dma.vmem_to_hbm [thread:$0]  %s957, 128, %s6, [#allocation4]
    $region45: #{lstm_forward.1} parent=1 // pred_fallthru
      _
    // Predicated region
    $region46: #{lstm_forward.1} parent=1 // pred_check
      _
    $region47: #{lstm_forward.1} parent=1 // pred_check_branch
      %961 = sbr.rel (0) target = $region49
    $region48: #{lstm_forward.1} parent=1 // pred_region
      %962 = dma.done [#allocation4], 128
    $region49: #{lstm_forward.1} parent=1 // pred_fallthru
      _
    %963 = vsyncpa [#allocation3], 1
    %964 = vsyncpa [#allocation6], 1
    %965 = vsyncpa [#allocation9], 1
    %966 = vsyncpa [#allocation4], 1

</llo_original>
